<compile_context>
chip_gen: v5e
topology: v5e:2x2
jax: 0.10.0
libtpu: 0.0.40
codegen_flags: <defaults>
</compile_context>

<pallas_src>
import jax
import jax.numpy as jnp
import numpy as np
from jax.experimental import pallas as pl
from jax.experimental.pallas import tpu as pltpu

# ---------------- problem sizes (small, consistent with the module) --------
INPUT_SHAPE = 8      # raw node feature dim
EMB = 32             # embedding_dim
NUM_ITERS = 2        # num_iterations
N_NODES = 16
N_EDGES = 48
N_GRAPHS = 2
LANE = 128           # lane width of both packed slabs

# ---- graph-operator slab row offsets (all 8-aligned) -----------------------
OP_X = 0                          # node features        [N, 8]        rows   0:16
OP_G = 16                         # [g_src; g_dst]       [2E, N]       rows  16:112
OP_EA = 112                       # [ea; ea] column      [2E, 1]       rows 112:208
OP_ABD = 208                      # blockdiag(a_in,a_out)[2N, 2E]      rows 208:240
OP_BOHT = 240                     # batch one-hot^T      [N, G]        rows 240:256
OP_BOHM = 256                     # normalized one-hot   [G, N]        rows 256:258
OP_ROWS = 264                     # padded to multiple of 8

# ---- weight slab row offsets (matrices 8-aligned; biases share one tile) ---
W_ENC = 0                         # initial encoder w    [8, 32]       rows   0:8
W_BIAS = 8                        # 8 bias/vector rows (see below)     rows   8:16
W_W1BD = 16                       # blockdiag(w1a, w2a)  [64, 64]      rows  16:80
W_W2BD = 80                       # blockdiag(w1b, w2b)  [64, 64]      rows  80:144
W_WFA = 144                       # final_agg fc weight  [96, 64]      rows 144:240
W_WFB = 240                       # final_agg fc2 weight [64, 32]      rows 240:304
W_WC = 304                        # conv1d(k=1) weight   [32, 64]      rows 304:336
W_ROWS = 336
# bias rows inside the W_BIAS block (row index within the slab):
#   8: b_enc[32]  9: w_edge[32]  10: b_edge[32]  11: [b1a|b2a][64]
#  12: [b1b|b2b][64]  13: b_fa[64]  14: b_fb[32]  15: b_c[64]


# ---------------------------- Pallas kernel --------------------------------
def gnn_kernel(op_ref, w_ref, out_ref):
    f32 = jnp.float32
    N, D, E, G = N_NODES, EMB, N_EDGES, N_GRAPHS

    # ---- hoisted weight loads (tile-aligned static slices) ----
    w_enc = w_ref[W_ENC:W_ENC + INPUT_SHAPE, 0:D]           # [8, 32]
    bias_blk = w_ref[W_BIAS:W_BIAS + 8, :]                   # one (8,128) tile
    b_enc = bias_blk[0:1, 0:D]                               # [1, 32]
    w_edge = bias_blk[1:2, 0:D]                              # [1, 32]
    b_edge = bias_blk[2:3, 0:D]                              # [1, 32]
    b_ab = bias_blk[3:4, 0:2 * D]                            # [1, 64]
    b_bb = bias_blk[4:5, 0:2 * D]                            # [1, 64]
    b_fa = bias_blk[5:6, 0:2 * D]                            # [1, 64]
    b_fb = bias_blk[6:7, 0:D]                                # [1, 32]
    b_c = bias_blk[7:8, 0:2 * D]                             # [1, 64]
    w1_bd = w_ref[W_W1BD:W_W1BD + 2 * D, 0:2 * D]            # [64, 64]
    w2_bd = w_ref[W_W2BD:W_W2BD + 2 * D, 0:2 * D]            # [64, 64]
    wfa = w_ref[W_WFA:W_WFA + 3 * D, 0:2 * D]                # [96, 64]
    wfb = w_ref[W_WFB:W_WFB + 2 * D, 0:D]                    # [64, 32]
    wc = w_ref[W_WC:W_WC + D, 0:2 * D]                       # [32, 64]

    # ---- hoisted graph operators ----
    x = op_ref[OP_X:OP_X + N, 0:INPUT_SHAPE]                 # [16, 8]
    g_stack = op_ref[OP_G:OP_G + 2 * E, 0:N]                 # [96, 16]
    ea = op_ref[OP_EA:OP_EA + 2 * E, 0:1]                    # [96, 1]
    a_bd = op_ref[OP_ABD:OP_ABD + 2 * N, 0:2 * E]            # [32, 96]
    boh_t = op_ref[OP_BOHT:OP_BOHT + N, 0:G]                 # [16, 2]
    boh_m = op_ref[OP_BOHM:OP_BOHM + G, 0:N]                 # [2, 16]

    # ---- initial encoders ----
    nodes = jnp.dot(x, w_enc, preferred_element_type=f32) + b_enc           # [N, D]
    # edge encoder (Linear(1, D)) = outer-product broadcast on the VPU;
    # loop-invariant, computed once for the stacked [in; out] edge rows.
    edge_enc = ea * w_edge + b_edge                                          # [2E, D]

    for _ in range(NUM_ITERS):
        # fused GINE message for both flows (rows 0:E use src nodes, E:2E dst)
        msg = jnp.maximum(
            jnp.dot(g_stack, nodes, preferred_element_type=f32) + edge_enc, 0.0)

        # scatter-add per flow: blockdiag(a_in, a_out) @ [msg_in; msg_out]
        agg = jnp.dot(a_bd, msg, preferred_element_type=f32)                 # [2N, D]

        # lane-packed GINE MLP input: [nodes + fi_agg | nodes + fo_agg]
        h = jnp.concatenate([agg[0:N, :] + nodes, agg[N:2 * N, :] + nodes],
                            axis=1)                                          # [N, 2D]

        # both 2-layer MLPs at once: block-diagonal layer weights -> no
        # cross terms, no quadrant mask needed.  t2 = [fi | fo].
        t1 = jnp.maximum(
            jnp.dot(h, w1_bd, preferred_element_type=f32) + b_ab, 0.0)       # [N, 2D]
        t2 = jnp.dot(t1, w2_bd, preferred_element_type=f32) + b_bb           # [N, 2D]

        # Final_Agg_edges: cat([nodes, fi, fo]) @ fc, relu, @ fc2 (dropout=id)
        cat3 = jnp.concatenate([nodes, t2], axis=1)                          # [N, 3D]
        upd_pre = jnp.maximum(
            jnp.dot(cat3, wfa, preferred_element_type=f32) + b_fa, 0.0)      # [N, 2D]
        nodes = nodes + jnp.dot(upd_pre, wfb,
                                preferred_element_type=f32) + b_fb           # [N, D]

    # conv1d with kernel size 1 == linear D -> 2D
    nodes2 = jnp.dot(nodes, wc, preferred_element_type=f32) + b_c            # [N, 2D]

    # mean pool as a matmul (boh_m pre-normalized in the wrapper)
    mn_all = jnp.dot(boh_m, nodes2, preferred_element_type=f32)              # [G, 2D]

    # max pool with per-graph node masks
    # NOTE: an empty graph yields finfo(float32).min for its max-pool half.
    neg = jnp.finfo(jnp.float32).min
    mx_rows = []
    for g in range(N_GRAPHS):
        mask = boh_t[:, g:g + 1] > 0.5                                       # [N, 1]
        mx_rows.append(jnp.max(jnp.where(mask, nodes2, neg),
                               axis=0, keepdims=True))                       # [1, 2D]
    mx_all = jnp.concatenate(mx_rows, axis=0)                                # [G, 2D]

    out_ref[...] = jnp.concatenate([mx_all, mn_all], axis=1)                 # [G, 4D]


def run_gnn(op_slab, w_slab):
    vmem = pl.BlockSpec(memory_space=pltpu.MemorySpace.VMEM)
    # rough FLOP count for the scheduler hint (matmuls only)
    per_iter = (2 * N_EDGES * N_NODES * EMB          # message matmul
                + 2 * N_NODES * 2 * N_EDGES * EMB    # aggregation matmul
                + 2 * N_NODES * 2 * EMB * 2 * EMB    # two MLP layers
                + N_NODES * 3 * EMB * 2 * EMB        # final_agg fc
                + N_NODES * 2 * EMB * EMB)           # final_agg fc2
    tail = (N_NODES * INPUT_SHAPE * EMB
            + N_NODES * EMB * 2 * EMB
            + N_GRAPHS * N_NODES * 2 * EMB)
    flops = 2 * (NUM_ITERS * per_iter + tail)
    bytes_accessed = 4 * (op_slab.size + w_slab.size + N_GRAPHS * 4 * EMB)
    return pl.pallas_call(
        gnn_kernel,
        out_shape=jax.ShapeDtypeStruct((N_GRAPHS, 4 * EMB), jnp.float32),
        in_specs=[vmem, vmem],
        out_specs=vmem,
        cost_estimate=pl.CostEstimate(flops=flops, transcendentals=0,
                                      bytes_accessed=bytes_accessed),
    )(op_slab, w_slab)


# ------------------------------ glue / params ------------------------------
def make_params(key):
    def linear(key, fan_in, fan_out):
        k1, k2 = jax.random.split(key)
        bound = 1.0 / np.sqrt(fan_in)
        w = jax.random.uniform(k1, (fan_in, fan_out), jnp.float32, -bound, bound)
        b = jax.random.uniform(k2, (1, fan_out), jnp.float32, -bound, bound)
        return w, b

    keys = jax.random.split(key, 9)
    p = {}
    p['enc'] = linear(keys[0], INPUT_SHAPE, EMB)       # initial_encoder
    p['edge'] = linear(keys[1], 1, EMB)                # edge_encoder
    p['mlp1a'] = linear(keys[2], EMB, EMB)             # mlp_1 (GINE parent)
    p['mlp1b'] = linear(keys[3], EMB, EMB)
    p['mlp2a'] = linear(keys[4], EMB, EMB)             # mlp_2 (GINE child)
    p['mlp2b'] = linear(keys[5], EMB, EMB)
    p['fca'] = linear(keys[6], 3 * EMB, 2 * EMB)       # Final_Agg_edges.fc
    p['fcb'] = linear(keys[7], 2 * EMB, EMB)           # Final_Agg_edges.fc2
    p['conv'] = linear(keys[8], EMB, 2 * EMB)          # Conv1d(k=1) as linear
    return p


def pack_weights(p):
    """Pack all 18 weight/bias arrays into one lane-128 slab, 8-aligned rows."""
    w_enc, b_enc = p['enc']
    w_edge, b_edge = p['edge']
    w1a, b1a = p['mlp1a']
    w1b, b1b = p['mlp1b']
    w2a, b2a = p['mlp2a']
    w2b, b2b = p['mlp2b']
    wfa, bfa = p['fca']
    wfb, bfb = p['fcb']
    wc, bc = p['conv']

    zD = jnp.zeros((EMB, EMB), jnp.float32)
    w1_bd = jnp.concatenate(
        [jnp.concatenate([w1a, zD], axis=1),
         jnp.concatenate([zD, w2a], axis=1)], axis=0)                 # [64, 64]
    w2_bd = jnp.concatenate(
        [jnp.concatenate([w1b, zD], axis=1),
         jnp.concatenate([zD, w2b], axis=1)], axis=0)                 # [64, 64]

    slab = jnp.zeros((W_ROWS, LANE), jnp.float32)
    slab = slab.at[W_ENC:W_ENC + INPUT_SHAPE, 0:EMB].set(w_enc)
    slab = slab.at[W_BIAS + 0, 0:EMB].set(b_enc[0])
    slab = slab.at[W_BIAS + 1, 0:EMB].set(w_edge[0])
    slab = slab.at[W_BIAS + 2, 0:EMB].set(b_edge[0])
    slab = slab.at[W_BIAS + 3, 0:2 * EMB].set(jnp.concatenate([b1a, b2a], axis=1)[0])
    slab = slab.at[W_BIAS + 4, 0:2 * EMB].set(jnp.concatenate([b1b, b2b], axis=1)[0])
    slab = slab.at[W_BIAS + 5, 0:2 * EMB].set(bfa[0])
    slab = slab.at[W_BIAS + 6, 0:EMB].set(bfb[0])
    slab = slab.at[W_BIAS + 7, 0:2 * EMB].set(bc[0])
    slab = slab.at[W_W1BD:W_W1BD + 2 * EMB, 0:2 * EMB].set(w1_bd)
    slab = slab.at[W_W2BD:W_W2BD + 2 * EMB, 0:2 * EMB].set(w2_bd)
    slab = slab.at[W_WFA:W_WFA + 3 * EMB, 0:2 * EMB].set(wfa)
    slab = slab.at[W_WFB:W_WFB + 2 * EMB, 0:EMB].set(wfb)
    slab = slab.at[W_WC:W_WC + EMB, 0:2 * EMB].set(wc)
    return slab


def build_op_slab(x, edges, edge_attr, batch):
    """Pack node features + graph operators into one lane-128 slab."""
    node_ids = jnp.arange(N_NODES)
    g_src = (edges[0][:, None] == node_ids[None, :]).astype(jnp.float32)   # [E, N]
    g_dst = (edges[1][:, None] == node_ids[None, :]).astype(jnp.float32)   # [E, N]
    g_stack = jnp.concatenate([g_src, g_dst], axis=0)                      # [2E, N]

    a_in = g_dst.T                                                         # [N, E]
    a_out = g_src.T                                                        # [N, E]
    z_ne = jnp.zeros((N_NODES, N_EDGES), jnp.float32)
    a_bd = jnp.concatenate(
        [jnp.concatenate([a_in, z_ne], axis=1),
         jnp.concatenate([z_ne, a_out], axis=1)], axis=0)                  # [2N, 2E]

    ea = edge_attr[:, None].astype(jnp.float32)                            # [E, 1]
    ea_stack = jnp.concatenate([ea, ea], axis=0)                           # [2E, 1]

    graph_ids = jnp.arange(N_GRAPHS)
    boh = (batch[None, :] == graph_ids[:, None]).astype(jnp.float32)       # [G, N]
    boh_mean = boh / jnp.sum(boh, axis=1, keepdims=True)                   # [G, N]
    boh_t = boh.T                                                          # [N, G]

    slab = jnp.zeros((OP_ROWS, LANE), jnp.float32)
    slab = slab.at[OP_X:OP_X + N_NODES, 0:INPUT_SHAPE].set(x)
    slab = slab.at[OP_G:OP_G + 2 * N_EDGES, 0:N_NODES].set(g_stack)
    slab = slab.at[OP_EA:OP_EA + 2 * N_EDGES, 0:1].set(ea_stack)
    slab = slab.at[OP_ABD:OP_ABD + 2 * N_NODES, 0:2 * N_EDGES].set(a_bd)
    slab = slab.at[OP_BOHT:OP_BOHT + N_NODES, 0:N_GRAPHS].set(boh_t)
    slab = slab.at[OP_BOHM:OP_BOHM + N_GRAPHS, 0:N_NODES].set(boh_mean)
    return slab


@jax.jit
def forward(x, edges, edge_attr, batch, w_slab):
    return run_gnn(build_op_slab(x, edges, edge_attr, batch), w_slab)


def reference(x, edges, edge_attr, batch, p):
    """Pure-JAX unfused reference (mirrors the PyTorch module, inference mode)."""
    def lin(v, wb):
        return v @ wb[0] + wb[1]

    node_ids = jnp.arange(N_NODES)
    g_src = (edges[0][:, None] == node_ids[None, :]).astype(jnp.float32)
    g_dst = (edges[1][:, None] == node_ids[None, :]).astype(jnp.float32)
    a_in = g_dst.T
    a_out = g_src.T

    nodes = lin(x, p['enc'])
    edge_enc = lin(edge_attr[:, None].astype(jnp.float32), p['edge'])
    for _ in range(NUM_ITERS):
        msg_in = jnp.maximum(g_src @ nodes + edge_enc, 0.0)
        fi = lin(jnp.maximum(lin(nodes + a_in @ msg_in, p['mlp1a']), 0.0), p['mlp1b'])
        msg_out = jnp.maximum(g_dst @ nodes + edge_enc, 0.0)
        fo = lin(jnp.maximum(lin(nodes + a_out @ msg_out, p['mlp2a']), 0.0), p['mlp2b'])
        cat = jnp.concatenate([nodes, fi, fo], axis=1)
        nodes = nodes + lin(jnp.maximum(lin(cat, p['fca']), 0.0), p['fcb'])
    nodes2 = lin(nodes, p['conv'])
    rows = []
    for g in range(N_GRAPHS):
        mask = (batch == g)[:, None]
        mx = jnp.max(jnp.where(mask, nodes2, jnp.finfo(jnp.float32).min),
                     axis=0, keepdims=True)
        cnt = jnp.sum(mask.astype(jnp.float32))
        mn = jnp.sum(jnp.where(mask, nodes2, 0.0), axis=0, keepdims=True) / cnt
        rows.append(jnp.concatenate([mx, mn], axis=1))
    return jnp.concatenate(rows, axis=0)


if __name__ == "__main__":
    key = jax.random.PRNGKey(0)
    k_x, k_e, k_attr, k_p = jax.random.split(key, 4)

    # node features, edge index, edge attributes, batch assignment
    x = jax.random.normal(k_x, (N_NODES, INPUT_SHAPE), jnp.float32)
    edges = jax.random.randint(k_e, (2, N_EDGES), 0, N_NODES, jnp.int32)
    edge_attr = jax.random.normal(k_attr, (N_EDGES,), jnp.float32)
    batch = jnp.concatenate([jnp.zeros((N_NODES // 2,), jnp.int32),
                             jnp.ones((N_NODES - N_NODES // 2,), jnp.int32)])

    params = make_params(k_p)
    w_slab = pack_weights(params)

    out = jax.block_until_ready(forward(x, edges, edge_attr, batch, w_slab))

    ref = reference(x, edges, edge_attr, batch, params)
    np.testing.assert_allclose(np.asarray(out), np.asarray(ref),
                               rtol=2e-2, atol=2e-2)
    print("KERNEL_OK")
</pallas_src>

<mosaic_0001>
module attributes {stable_mosaic.version = 11 : i64} {
  func.func @gnn_kernel(%arg0: memref<264x128xf32, #tpu.memory_space<vmem>>, %arg1: memref<336x128xf32, #tpu.memory_space<vmem>>, %arg2: memref<2x128xf32, #tpu.memory_space<vmem>>) attributes {dimension_semantics = [], scalar_prefetch = 0 : i64, scratch_operands = 0 : i64, tpu.core_type = #tpu.core_type<tc>} {
    %c0 = arith.constant 0 : index
    %c0_0 = arith.constant 0 : index
    %0 = vector.load %arg1[%c0, %c0_0] : memref<336x128xf32, #tpu.memory_space<vmem>>, vector<8x32xf32>
    %c8 = arith.constant 8 : index
    %c0_1 = arith.constant 0 : index
    %1 = vector.load %arg1[%c8, %c0_1] : memref<336x128xf32, #tpu.memory_space<vmem>>, vector<8x128xf32>
    %2 = vector.extract_strided_slice %1 {offsets = [0, 0], sizes = [1, 32], strides = [1, 1]} : vector<8x128xf32> to vector<1x32xf32>
    %3 = vector.extract_strided_slice %1 {offsets = [1, 0], sizes = [1, 32], strides = [1, 1]} : vector<8x128xf32> to vector<1x32xf32>
    %4 = vector.extract_strided_slice %1 {offsets = [2, 0], sizes = [1, 32], strides = [1, 1]} : vector<8x128xf32> to vector<1x32xf32>
    %5 = vector.extract_strided_slice %1 {offsets = [3, 0], sizes = [1, 64], strides = [1, 1]} : vector<8x128xf32> to vector<1x64xf32>
    %6 = vector.extract_strided_slice %1 {offsets = [4, 0], sizes = [1, 64], strides = [1, 1]} : vector<8x128xf32> to vector<1x64xf32>
    %7 = vector.extract_strided_slice %1 {offsets = [5, 0], sizes = [1, 64], strides = [1, 1]} : vector<8x128xf32> to vector<1x64xf32>
    %8 = vector.extract_strided_slice %1 {offsets = [6, 0], sizes = [1, 32], strides = [1, 1]} : vector<8x128xf32> to vector<1x32xf32>
    %9 = vector.extract_strided_slice %1 {offsets = [7, 0], sizes = [1, 64], strides = [1, 1]} : vector<8x128xf32> to vector<1x64xf32>
    %c16 = arith.constant 16 : index
    %c0_2 = arith.constant 0 : index
    %10 = vector.load %arg1[%c16, %c0_2] : memref<336x128xf32, #tpu.memory_space<vmem>>, vector<64x64xf32>
    %c80 = arith.constant 80 : index
    %c0_3 = arith.constant 0 : index
    %11 = vector.load %arg1[%c80, %c0_3] : memref<336x128xf32, #tpu.memory_space<vmem>>, vector<64x64xf32>
    %c144 = arith.constant 144 : index
    %c0_4 = arith.constant 0 : index
    %12 = vector.load %arg1[%c144, %c0_4] : memref<336x128xf32, #tpu.memory_space<vmem>>, vector<96x64xf32>
    %c240 = arith.constant 240 : index
    %c0_5 = arith.constant 0 : index
    %13 = vector.load %arg1[%c240, %c0_5] : memref<336x128xf32, #tpu.memory_space<vmem>>, vector<64x32xf32>
    %c304 = arith.constant 304 : index
    %c0_6 = arith.constant 0 : index
    %14 = vector.load %arg1[%c304, %c0_6] : memref<336x128xf32, #tpu.memory_space<vmem>>, vector<32x64xf32>
    %c0_7 = arith.constant 0 : index
    %c0_8 = arith.constant 0 : index
    %15 = vector.load %arg0[%c0_7, %c0_8] : memref<264x128xf32, #tpu.memory_space<vmem>>, vector<16x8xf32>
    %c16_9 = arith.constant 16 : index
    %c0_10 = arith.constant 0 : index
    %16 = vector.load %arg0[%c16_9, %c0_10] : memref<264x128xf32, #tpu.memory_space<vmem>>, vector<96x16xf32>
    %c112 = arith.constant 112 : index
    %c0_11 = arith.constant 0 : index
    %17 = vector.load %arg0[%c112, %c0_11] : memref<264x128xf32, #tpu.memory_space<vmem>>, vector<96x1xf32>
    %c208 = arith.constant 208 : index
    %c0_12 = arith.constant 0 : index
    %18 = vector.load %arg0[%c208, %c0_12] : memref<264x128xf32, #tpu.memory_space<vmem>>, vector<32x96xf32>
    %c240_13 = arith.constant 240 : index
    %c0_14 = arith.constant 0 : index
    %19 = vector.load %arg0[%c240_13, %c0_14] : memref<264x128xf32, #tpu.memory_space<vmem>>, vector<16x2xf32>
    %c256 = arith.constant 256 : index
    %c0_15 = arith.constant 0 : index
    %20 = vector.load %arg0[%c256, %c0_15] : memref<264x128xf32, #tpu.memory_space<vmem>>, vector<2x16xf32>
    %cst = arith.constant dense<0.000000e+00> : vector<16x32xf32>
    %21 = tpu.matmul %15, %0, %cst {dimension_numbers = #tpu.dot_dimension_numbers<[1], [0], [0], [1], [0, 0, 1, 1], [], []>} : vector<16x8xf32>, vector<8x32xf32>, vector<16x32xf32> -> vector<16x32xf32>
    %22 = vector.broadcast %2 : vector<1x32xf32> to vector<16x32xf32>
    %23 = arith.addf %21, %22 : vector<16x32xf32>
    %24 = vector.broadcast %17 : vector<96x1xf32> to vector<96x32xf32>
    %25 = vector.broadcast %3 : vector<1x32xf32> to vector<96x32xf32>
    %26 = arith.mulf %24, %25 : vector<96x32xf32>
    %27 = vector.broadcast %4 : vector<1x32xf32> to vector<96x32xf32>
    %28 = arith.addf %26, %27 : vector<96x32xf32>
    %cst_16 = arith.constant dense<0.000000e+00> : vector<96x32xf32>
    %29 = tpu.matmul %16, %23, %cst_16 {dimension_numbers = #tpu.dot_dimension_numbers<[1], [0], [0], [1], [0, 0, 1, 1], [], []>} : vector<96x16xf32>, vector<16x32xf32>, vector<96x32xf32> -> vector<96x32xf32>
    %30 = arith.addf %29, %28 : vector<96x32xf32>
    %cst_17 = arith.constant 0.000000e+00 : f32
    %31 = vector.broadcast %cst_17 : f32 to vector<96x32xf32>
    %32 = arith.maximumf %30, %31 : vector<96x32xf32>
    %cst_18 = arith.constant dense<0.000000e+00> : vector<32x32xf32>
    %33 = tpu.matmul %18, %32, %cst_18 {dimension_numbers = #tpu.dot_dimension_numbers<[1], [0], [0], [1], [0, 0, 1, 1], [], []>} : vector<32x96xf32>, vector<96x32xf32>, vector<32x32xf32> -> vector<32x32xf32>
    %34 = vector.extract_strided_slice %33 {offsets = [0, 0], sizes = [16, 32], strides = [1, 1]} : vector<32x32xf32> to vector<16x32xf32>
    %35 = arith.addf %34, %23 : vector<16x32xf32>
    %36 = vector.extract_strided_slice %33 {offsets = [16, 0], sizes = [16, 32], strides = [1, 1]} : vector<32x32xf32> to vector<16x32xf32>
    %37 = arith.addf %36, %23 : vector<16x32xf32>
    %38 = tpu.concatenate %35, %37 in 1 : vector<16x32xf32>, vector<16x32xf32> -> vector<16x64xf32>
    %cst_19 = arith.constant dense<0.000000e+00> : vector<16x64xf32>
    %39 = tpu.matmul %38, %10, %cst_19 {dimension_numbers = #tpu.dot_dimension_numbers<[1], [0], [0], [1], [0, 0, 1, 1], [], []>} : vector<16x64xf32>, vector<64x64xf32>, vector<16x64xf32> -> vector<16x64xf32>
    %40 = vector.broadcast %5 : vector<1x64xf32> to vector<16x64xf32>
    %41 = arith.addf %39, %40 : vector<16x64xf32>
    %cst_20 = arith.constant 0.000000e+00 : f32
    %42 = vector.broadcast %cst_20 : f32 to vector<16x64xf32>
    %43 = arith.maximumf %41, %42 : vector<16x64xf32>
    %cst_21 = arith.constant dense<0.000000e+00> : vector<16x64xf32>
    %44 = tpu.matmul %43, %11, %cst_21 {dimension_numbers = #tpu.dot_dimension_numbers<[1], [0], [0], [1], [0, 0, 1, 1], [], []>} : vector<16x64xf32>, vector<64x64xf32>, vector<16x64xf32> -> vector<16x64xf32>
    %45 = vector.broadcast %6 : vector<1x64xf32> to vector<16x64xf32>
    %46 = arith.addf %44, %45 : vector<16x64xf32>
    %47 = tpu.concatenate %23, %46 in 1 : vector<16x32xf32>, vector<16x64xf32> -> vector<16x96xf32>
    %cst_22 = arith.constant dense<0.000000e+00> : vector<16x64xf32>
    %48 = tpu.matmul %47, %12, %cst_22 {dimension_numbers = #tpu.dot_dimension_numbers<[1], [0], [0], [1], [0, 0, 1, 1], [], []>} : vector<16x96xf32>, vector<96x64xf32>, vector<16x64xf32> -> vector<16x64xf32>
    %49 = vector.broadcast %7 : vector<1x64xf32> to vector<16x64xf32>
    %50 = arith.addf %48, %49 : vector<16x64xf32>
    %cst_23 = arith.constant 0.000000e+00 : f32
    %51 = vector.broadcast %cst_23 : f32 to vector<16x64xf32>
    %52 = arith.maximumf %50, %51 : vector<16x64xf32>
    %cst_24 = arith.constant dense<0.000000e+00> : vector<16x32xf32>
    %53 = tpu.matmul %52, %13, %cst_24 {dimension_numbers = #tpu.dot_dimension_numbers<[1], [0], [0], [1], [0, 0, 1, 1], [], []>} : vector<16x64xf32>, vector<64x32xf32>, vector<16x32xf32> -> vector<16x32xf32>
    %54 = arith.addf %23, %53 : vector<16x32xf32>
    %55 = vector.broadcast %8 : vector<1x32xf32> to vector<16x32xf32>
    %56 = arith.addf %54, %55 : vector<16x32xf32>
    %cst_25 = arith.constant dense<0.000000e+00> : vector<96x32xf32>
    %57 = tpu.matmul %16, %56, %cst_25 {dimension_numbers = #tpu.dot_dimension_numbers<[1], [0], [0], [1], [0, 0, 1, 1], [], []>} : vector<96x16xf32>, vector<16x32xf32>, vector<96x32xf32> -> vector<96x32xf32>
    %58 = arith.addf %57, %28 : vector<96x32xf32>
    %cst_26 = arith.constant 0.000000e+00 : f32
    %59 = vector.broadcast %cst_26 : f32 to vector<96x32xf32>
    %60 = arith.maximumf %58, %59 : vector<96x32xf32>
    %cst_27 = arith.constant dense<0.000000e+00> : vector<32x32xf32>
    %61 = tpu.matmul %18, %60, %cst_27 {dimension_numbers = #tpu.dot_dimension_numbers<[1], [0], [0], [1], [0, 0, 1, 1], [], []>} : vector<32x96xf32>, vector<96x32xf32>, vector<32x32xf32> -> vector<32x32xf32>
    %62 = vector.extract_strided_slice %61 {offsets = [0, 0], sizes = [16, 32], strides = [1, 1]} : vector<32x32xf32> to vector<16x32xf32>
    %63 = arith.addf %62, %56 : vector<16x32xf32>
    %64 = vector.extract_strided_slice %61 {offsets = [16, 0], sizes = [16, 32], strides = [1, 1]} : vector<32x32xf32> to vector<16x32xf32>
    %65 = arith.addf %64, %56 : vector<16x32xf32>
    %66 = tpu.concatenate %63, %65 in 1 : vector<16x32xf32>, vector<16x32xf32> -> vector<16x64xf32>
    %cst_28 = arith.constant dense<0.000000e+00> : vector<16x64xf32>
    %67 = tpu.matmul %66, %10, %cst_28 {dimension_numbers = #tpu.dot_dimension_numbers<[1], [0], [0], [1], [0, 0, 1, 1], [], []>} : vector<16x64xf32>, vector<64x64xf32>, vector<16x64xf32> -> vector<16x64xf32>
    %68 = vector.broadcast %5 : vector<1x64xf32> to vector<16x64xf32>
    %69 = arith.addf %67, %68 : vector<16x64xf32>
    %cst_29 = arith.constant 0.000000e+00 : f32
    %70 = vector.broadcast %cst_29 : f32 to vector<16x64xf32>
    %71 = arith.maximumf %69, %70 : vector<16x64xf32>
    %cst_30 = arith.constant dense<0.000000e+00> : vector<16x64xf32>
    %72 = tpu.matmul %71, %11, %cst_30 {dimension_numbers = #tpu.dot_dimension_numbers<[1], [0], [0], [1], [0, 0, 1, 1], [], []>} : vector<16x64xf32>, vector<64x64xf32>, vector<16x64xf32> -> vector<16x64xf32>
    %73 = vector.broadcast %6 : vector<1x64xf32> to vector<16x64xf32>
    %74 = arith.addf %72, %73 : vector<16x64xf32>
    %75 = tpu.concatenate %56, %74 in 1 : vector<16x32xf32>, vector<16x64xf32> -> vector<16x96xf32>
    %cst_31 = arith.constant dense<0.000000e+00> : vector<16x64xf32>
    %76 = tpu.matmul %75, %12, %cst_31 {dimension_numbers = #tpu.dot_dimension_numbers<[1], [0], [0], [1], [0, 0, 1, 1], [], []>} : vector<16x96xf32>, vector<96x64xf32>, vector<16x64xf32> -> vector<16x64xf32>
    %77 = vector.broadcast %7 : vector<1x64xf32> to vector<16x64xf32>
    %78 = arith.addf %76, %77 : vector<16x64xf32>
    %cst_32 = arith.constant 0.000000e+00 : f32
    %79 = vector.broadcast %cst_32 : f32 to vector<16x64xf32>
    %80 = arith.maximumf %78, %79 : vector<16x64xf32>
    %cst_33 = arith.constant dense<0.000000e+00> : vector<16x32xf32>
    %81 = tpu.matmul %80, %13, %cst_33 {dimension_numbers = #tpu.dot_dimension_numbers<[1], [0], [0], [1], [0, 0, 1, 1], [], []>} : vector<16x64xf32>, vector<64x32xf32>, vector<16x32xf32> -> vector<16x32xf32>
    %82 = arith.addf %56, %81 : vector<16x32xf32>
    %83 = vector.broadcast %8 : vector<1x32xf32> to vector<16x32xf32>
    %84 = arith.addf %82, %83 : vector<16x32xf32>
    %cst_34 = arith.constant dense<0.000000e+00> : vector<16x64xf32>
    %85 = tpu.matmul %84, %14, %cst_34 {dimension_numbers = #tpu.dot_dimension_numbers<[1], [0], [0], [1], [0, 0, 1, 1], [], []>} : vector<16x32xf32>, vector<32x64xf32>, vector<16x64xf32> -> vector<16x64xf32>
    %86 = vector.broadcast %9 : vector<1x64xf32> to vector<16x64xf32>
    %87 = arith.addf %85, %86 : vector<16x64xf32>
    %cst_35 = arith.constant dense<0.000000e+00> : vector<2x64xf32>
    %88 = tpu.matmul %20, %87, %cst_35 {dimension_numbers = #tpu.dot_dimension_numbers<[1], [0], [0], [1], [0, 0, 1, 1], [], []>} : vector<2x16xf32>, vector<16x64xf32>, vector<2x64xf32> -> vector<2x64xf32>
    %89 = vector.extract_strided_slice %19 {offsets = [0, 0], sizes = [16, 1], strides = [1, 1]} : vector<16x2xf32> to vector<16x1xf32>
    %cst_36 = arith.constant 5.000000e-01 : f32
    %90 = vector.broadcast %cst_36 : f32 to vector<16x1xf32>
    %91 = arith.cmpf ogt, %89, %90 : vector<16x1xf32>
    %cst_37 = arith.constant -3.40282347E+38 : f32
    %92 = vector.shape_cast %91 : vector<16x1xi1> to vector<16x1xi1>
    %93 = vector.broadcast %92 : vector<16x1xi1> to vector<16x64xi1>
    %94 = vector.broadcast %cst_37 : f32 to vector<16x64xf32>
    %95 = arith.select %93, %87, %94 : vector<16x64xi1>, vector<16x64xf32>
    %cst_38 = arith.constant dense<0xFF800000> : vector<64xf32>
    %96 = vector.multi_reduction <maximumf>, %95, %cst_38 [0] : vector<16x64xf32> to vector<64xf32>
    %97 = vector.shape_cast %96 : vector<64xf32> to vector<1x64xf32>
    %98 = vector.extract_strided_slice %19 {offsets = [0, 1], sizes = [16, 1], strides = [1, 1]} : vector<16x2xf32> to vector<16x1xf32>
    %cst_39 = arith.constant 5.000000e-01 : f32
    %99 = vector.broadcast %cst_39 : f32 to vector<16x1xf32>
    %100 = arith.cmpf ogt, %98, %99 : vector<16x1xf32>
    %cst_40 = arith.constant -3.40282347E+38 : f32
    %101 = vector.shape_cast %100 : vector<16x1xi1> to vector<16x1xi1>
    %102 = vector.broadcast %101 : vector<16x1xi1> to vector<16x64xi1>
    %103 = vector.broadcast %cst_40 : f32 to vector<16x64xf32>
    %104 = arith.select %102, %87, %103 : vector<16x64xi1>, vector<16x64xf32>
    %cst_41 = arith.constant dense<0xFF800000> : vector<64xf32>
    %105 = vector.multi_reduction <maximumf>, %104, %cst_41 [0] : vector<16x64xf32> to vector<64xf32>
    %106 = vector.shape_cast %105 : vector<64xf32> to vector<1x64xf32>
    %107 = tpu.concatenate %97, %106 in 0 : vector<1x64xf32>, vector<1x64xf32> -> vector<2x64xf32>
    %108 = tpu.concatenate %107, %88 in 1 : vector<2x64xf32>, vector<2x64xf32> -> vector<2x128xf32>
    %c0_42 = arith.constant 0 : index
    %c0_43 = arith.constant 0 : index
    %109 = vector.load %arg2[%c0_42, %c0_43] : memref<2x128xf32, #tpu.memory_space<vmem>>, vector<2x128xf32>
    tpu.vector_store %arg2[%c0_42, %c0_43], %108 {strides = array<i32>} : memref<2x128xf32, #tpu.memory_space<vmem>>, vector<2x128xf32>,
    return
  }
}

</mosaic_0001>

<llo_original>
// kernel: forward.1
$region0: #{forward.1}
  #allocation0 [shape = 'u32[]', space=smem, size = 0x4, offset = 0x4, fixed_abs, tag = 'smem constant byte address 0x4 - core index']
  #allocation1 [shape = 'u32[72,128]{1,0:T(1,128)}', space=vmem, size = 0x9000, scoped, tag = 'internal scratch']
  %s0 = inlined_call_operand.vmem [shape: f32[264,128], index: 0, kind: input, shape index: {}]
  %s1 = inlined_call_operand.vmem [shape: f32[336,128], index: 1, kind: input, shape index: {}]
  %s2 = inlined_call_operand.hbm [shape: f32[2,128], index: 2, kind: output, shape index: {}]
  %s3 = sld [smem:[#allocation0]]
  $region18: #{forward.1} parent=0
    _
  %s5 = ssub.s32 1, %s3
  %s6 = scalar_select 0, %s5, %s3
  $region1: #{forward.1} parent=0
    #allocation2 [shape = 'u8[1024]{0}', space=vmem, size = 0x400, scoped, tag = 'output window, operand 0, single buffered']
    #allocation3 [shape = 's32[1]{0}', space=sflag, size = 0x4, scoped, tag = 'scoped memory for forward.1']
    %7 = vsyncpa [#allocation3], 0
    // Predicated region
    $region2: #{forward.1} parent=1 // pred_check
      _
    $region3: #{forward.1} parent=1 // pred_check_branch
      %9 = sbr.rel (0) target = $region5
    $region4: #{forward.1} parent=1 // pred_region
      _
    $region5: #{forward.1} parent=1 // pred_fallthru
      _
    // Predicated region
    $region6: #{forward.1} parent=1 // pred_check
      _
    $region7: #{forward.1} parent=1 // pred_check_branch
      %11 = sbr.rel (0) target = $region9
    $region8: #{forward.1} parent=1 // pred_region
      _
    $region9: #{forward.1} parent=1 // pred_fallthru
      _
    %v12 = vld [vmem:[%s1] sm:$0xff]
    %v13 = vld [vmem:[%s1 + $0x8] sm:$0xff]
    %v14 = vld [vmem:[%s1 + $0x10] sm:$0xff]
    %v15 = vld [vmem:[%s1 + $0x18] sm:$0xff]
    %v16 = vld [vmem:[%s1 + $0x20] sm:$0xff]
    %v17 = vld [vmem:[%s1 + $0x28] sm:$0xff]
    %v18 = vld [vmem:[%s1 + $0x30] sm:$0xff]
    %v19 = vld [vmem:[%s1 + $0x38] sm:$0xff]
    %v20 = vld [vmem:[%s1 + $0x40] sm:$0xff]
    %v21 = vld [vmem:[%s1 + $0x48] sm:$0xff]
    %v22 = vld [vmem:[%s1 + $0x50] sm:$0xff]
    %v23 = vld [vmem:[%s1 + $0x58] sm:$0xff]
    %v24 = vld [vmem:[%s1 + $0x60] sm:$0xff]
    %v25 = vld [vmem:[%s1 + $0x68] sm:$0xff]
    %v26 = vld [vmem:[%s1 + $0x70] sm:$0xff]
    %v27 = vld [vmem:[%s1 + $0x78] sm:$0xff]
    %v28 = vld [vmem:[%s1 + $0x80] sm:$0xff]
    %v29 = vld [vmem:[%s1 + $0x88] sm:$0xff]
    %v30 = vld [vmem:[%s1 + $0x90] sm:$0xff]
    %v31 = vld [vmem:[%s1 + $0x98] sm:$0xff]
    %v32 = vld [vmem:[%s1 + $0xa0] sm:$0xff]
    %v33 = vld [vmem:[%s1 + $0xa8] sm:$0xff]
    %v34 = vld [vmem:[%s1 + $0xb0] sm:$0xff]
    %v35 = vld [vmem:[%s1 + $0xb8] sm:$0xff]
    %v36 = vld [vmem:[%s1 + $0xc0] sm:$0xff]
    %v37 = vld [vmem:[%s1 + $0xc8] sm:$0xff]
    %v38 = vld [vmem:[%s1 + $0xd0] sm:$0xff]
    %v39 = vld [vmem:[%s1 + $0xd8] sm:$0xff]
    %v40 = vld [vmem:[%s1 + $0xe0] sm:$0xff]
    %v41 = vld [vmem:[%s1 + $0xe8] sm:$0xff]
    %v42 = vld [vmem:[%s1 + $0xf0] sm:$0xff]
    %v43 = vld [vmem:[%s1 + $0xf8] sm:$0xff]
    %v44 = vld [vmem:[%s1 + $0x100] sm:$0xff]
    %v45 = vld [vmem:[%s1 + $0x108] sm:$0xff]
    %v46 = vld [vmem:[%s1 + $0x110] sm:$0xff]
    %v47 = vld [vmem:[%s1 + $0x118] sm:$0xff]
    %v48 = vld [vmem:[%s1 + $0x120] sm:$0xff]
    %v49 = vld [vmem:[%s1 + $0x128] sm:$0xff]
    %v50 = vld [vmem:[%s1 + $0x130] sm:$0xff]
    %v51 = vld [vmem:[%s1 + $0x138] sm:$0xff]
    %v52 = vld [vmem:[%s1 + $0x140] sm:$0xff]
    %v53 = vld [vmem:[%s1 + $0x148] sm:$0xff]
    %v54 = vld [vmem:[%s0] sm:$0xff]
    %v55 = vld [vmem:[%s0 + $0x8] sm:$0xff]
    %v56 = vld [vmem:[%s0 + $0x10] sm:$0xff]
    %v57 = vld [vmem:[%s0 + $0x18] sm:$0xff]
    %v58 = vld [vmem:[%s0 + $0x20] sm:$0xff]
    %v59 = vld [vmem:[%s0 + $0x28] sm:$0xff]
    %v60 = vld [vmem:[%s0 + $0x30] sm:$0xff]
    %v61 = vld [vmem:[%s0 + $0x38] sm:$0xff]
    %v62 = vld [vmem:[%s0 + $0x40] sm:$0xff]
    %v63 = vld [vmem:[%s0 + $0x48] sm:$0xff]
    %v64 = vld [vmem:[%s0 + $0x50] sm:$0xff]
    %v65 = vld [vmem:[%s0 + $0x58] sm:$0xff]
    %v66 = vld [vmem:[%s0 + $0x60] sm:$0xff]
    %v67 = vld [vmem:[%s0 + $0x68] sm:$0xff]
    %v68 = vld [vmem:[%s0 + $0x70] sm:$0xff]
    %v69 = vld [vmem:[%s0 + $0x78] sm:$0xff]
    %v70 = vld [vmem:[%s0 + $0x80] sm:$0xff]
    %v71 = vld [vmem:[%s0 + $0x88] sm:$0xff]
    %v72 = vld [vmem:[%s0 + $0x90] sm:$0xff]
    %v73 = vld [vmem:[%s0 + $0x98] sm:$0xff]
    %v74 = vld [vmem:[%s0 + $0xa0] sm:$0xff]
    %v75 = vld [vmem:[%s0 + $0xa8] sm:$0xff]
    %v76 = vld [vmem:[%s0 + $0xb0] sm:$0xff]
    %v77 = vld [vmem:[%s0 + $0xb8] sm:$0xff]
    %v78 = vld [vmem:[%s0 + $0xc0] sm:$0xff]
    %v79 = vld [vmem:[%s0 + $0xc8] sm:$0xff]
    %v80 = vld [vmem:[%s0 + $0xd0] sm:$0xff]
    %v81 = vld [vmem:[%s0 + $0xd8] sm:$0xff]
    %v82 = vld [vmem:[%s0 + $0xe0] sm:$0xff]
    %v83 = vld [vmem:[%s0 + $0xe8] sm:$0xff]
    %v84 = vld [vmem:[%s0 + $0xf0] sm:$0xff]
    %v85 = vld [vmem:[%s0 + $0xf8] sm:$0xff]
    %v86 = vld [vmem:[%s0 + $0x100] sm:$0x3]
    %v87 = vperm.slane %v13, 0
    %vm88 = vcmask 64512
    %v90 = vsel %vm88, %v54, 0
    %v93 = vsel %vm88, %v55, 0
    %95 = vmatpush.msra.mxu0 0.0
    %96 = vmatpush.msra.mxu0 0.0
    %97 = vmatpush.msra.mxu0 0.0
    %98 = vmatpush.msra.mxu0 0.0
    %99 = vmatpush.msra.mxu0 0.0
    %100 = vmatpush.msra.mxu0 0.0
    %101 = vmatpush.msra.mxu0 0.0
    %102 = vmatpush.msra.mxu0 0.0
    %103 = vmatpush.msra.mxu0 0.0
    %104 = vmatpush.msra.mxu0 0.0
    %105 = vmatpush.msra.mxu0 0.0
    %106 = vmatpush.msra.mxu0 0.0
    %107 = vmatpush.msra.mxu0 0.0
    %108 = vmatpush.msra.mxu0 0.0
    %109 = vmatpush.msra.mxu0 0.0
    %110 = vmatpush.msra.mxu0 %v12
    %111 = vmatmul.f32.gmra.mxu0 %v90
    %v112 = vpop.f32.mrf.mxu0
    %v113 = vadd.f32 %v87, %v112
    %114 = vmatmul.f32.gmra.mxu0 %v93
    %v115 = vpop.f32.mrf.mxu0
    %v116 = vadd.f32 %v87, %v115
    %117 = vdwg.mxu0
    %119 = vset.pattern.permute.xlu0 0
    %120 = vperm.xlu0 %119, %v68
    %v121 = vpop.permute.xlu0 %120
    %124 = vset.pattern.permute.xlu0 0
    %125 = vperm.xlu0 %124, %v69
    %v126 = vpop.permute.xlu0 %125
    %129 = vset.pattern.permute.xlu0 0
    %130 = vperm.xlu0 %129, %v70
    %v131 = vpop.permute.xlu0 %130
    %134 = vset.pattern.permute.xlu0 0
    %135 = vperm.xlu0 %134, %v71
    %v136 = vpop.permute.xlu0 %135
    %139 = vset.pattern.permute.xlu0 0
    %140 = vperm.xlu0 %139, %v72
    %v141 = vpop.permute.xlu0 %140
    %144 = vset.pattern.permute.xlu0 0
    %145 = vperm.xlu0 %144, %v73
    %v146 = vpop.permute.xlu0 %145
    %149 = vset.pattern.permute.xlu0 0
    %150 = vperm.xlu0 %149, %v74
    %v151 = vpop.permute.xlu0 %150
    %154 = vset.pattern.permute.xlu0 0
    %155 = vperm.xlu0 %154, %v75
    %v156 = vpop.permute.xlu0 %155
    %159 = vset.pattern.permute.xlu0 0
    %160 = vperm.xlu0 %159, %v76
    %v161 = vpop.permute.xlu0 %160
    %164 = vset.pattern.permute.xlu0 0
    %165 = vperm.xlu0 %164, %v77
    %v166 = vpop.permute.xlu0 %165
    %169 = vset.pattern.permute.xlu0 0
    %170 = vperm.xlu0 %169, %v78
    %v171 = vpop.permute.xlu0 %170
    %174 = vset.pattern.permute.xlu0 0
    %175 = vperm.xlu0 %174, %v79
    %v176 = vpop.permute.xlu0 %175
    %v178 = vperm.slane %v13, 1
    %v179 = vmul.f32 %v121, %v178
    %v180 = vmul.f32 %v126, %v178
    %v181 = vmul.f32 %v131, %v178
    %v182 = vmul.f32 %v136, %v178
    %v183 = vmul.f32 %v141, %v178
    %v184 = vmul.f32 %v146, %v178
    %v185 = vmul.f32 %v151, %v178
    %v186 = vmul.f32 %v156, %v178
    %v187 = vmul.f32 %v161, %v178
    %v188 = vmul.f32 %v166, %v178
    %v189 = vmul.f32 %v171, %v178
    %v190 = vmul.f32 %v176, %v178
    %v191 = vperm.slane %v13, 2
    %v192 = vadd.f32 %v179, %v191
    %v193 = vadd.f32 %v180, %v191
    %v194 = vadd.f32 %v181, %v191
    %v195 = vadd.f32 %v182, %v191
    %v196 = vadd.f32 %v183, %v191
    %v197 = vadd.f32 %v184, %v191
    %v198 = vadd.f32 %v185, %v191
    %v199 = vadd.f32 %v186, %v191
    %v200 = vadd.f32 %v187, %v191
    %v201 = vadd.f32 %v188, %v191
    %v202 = vadd.f32 %v189, %v191
    %v203 = vadd.f32 %v190, %v191
    %vm204 = vcmask 130048
    %v206 = vsel %vm204, %v56, 0
    %v209 = vsel %vm204, %v57, 0
    %v212 = vsel %vm204, %v58, 0
    %v215 = vsel %vm204, %v59, 0
    %v218 = vsel %vm204, %v60, 0
    %v221 = vsel %vm204, %v61, 0
    %v224 = vsel %vm204, %v62, 0
    %v227 = vsel %vm204, %v63, 0
    %v230 = vsel %vm204, %v64, 0
    %v233 = vsel %vm204, %v65, 0
    %v236 = vsel %vm204, %v66, 0
    %v239 = vsel %vm204, %v67, 0
    %241 = vmatpush.msra.mxu0 0.0
    %242 = vmatpush.msra.mxu0 0.0
    %243 = vmatpush.msra.mxu0 0.0
    %244 = vmatpush.msra.mxu0 0.0
    %245 = vmatpush.msra.mxu0 0.0
    %246 = vmatpush.msra.mxu0 0.0
    %247 = vmatpush.msra.mxu0 0.0
    %248 = vmatpush.msra.mxu0 0.0
    %249 = vmatpush.msra.mxu0 0.0
    %250 = vmatpush.msra.mxu0 0.0
    %251 = vmatpush.msra.mxu0 0.0
    %252 = vmatpush.msra.mxu0 0.0
    %253 = vmatpush.msra.mxu0 0.0
    %254 = vmatpush.msra.mxu0 0.0
    %255 = vmatpush.msra.mxu0 %v116
    %256 = vmatpush.msra.mxu0 %v113
    %257 = vmatmul.f32.gmra.mxu0 %v206
    %v258 = vpop.f32.mrf.mxu0
    %v259 = vadd.f32 %v192, %v258
    %260 = vmatmul.f32.gmra.mxu0 %v209
    %v261 = vpop.f32.mrf.mxu0
    %v262 = vadd.f32 %v193, %v261
    %263 = vmatmul.f32.gmra.mxu0 %v212
    %v264 = vpop.f32.mrf.mxu0
    %v265 = vadd.f32 %v194, %v264
    %266 = vmatmul.f32.gmra.mxu0 %v215
    %v267 = vpop.f32.mrf.mxu0
    %v268 = vadd.f32 %v195, %v267
    %269 = vmatmul.f32.gmra.mxu0 %v218
    %v270 = vpop.f32.mrf.mxu0
    %v271 = vadd.f32 %v196, %v270
    %272 = vmatmul.f32.gmra.mxu0 %v221
    %v273 = vpop.f32.mrf.mxu0
    %v274 = vadd.f32 %v197, %v273
    %275 = vmatmul.f32.gmra.mxu0 %v224
    %v276 = vpop.f32.mrf.mxu0
    %v277 = vadd.f32 %v198, %v276
    %278 = vmatmul.f32.gmra.mxu0 %v227
    %v279 = vpop.f32.mrf.mxu0
    %v280 = vadd.f32 %v199, %v279
    %281 = vmatmul.f32.gmra.mxu0 %v230
    %v282 = vpop.f32.mrf.mxu0
    %v283 = vadd.f32 %v200, %v282
    %284 = vmatmul.f32.gmra.mxu0 %v233
    %v285 = vpop.f32.mrf.mxu0
    %v286 = vadd.f32 %v201, %v285
    %287 = vmatmul.f32.gmra.mxu0 %v236
    %v288 = vpop.f32.mrf.mxu0
    %v289 = vadd.f32 %v202, %v288
    %290 = vmatmul.f32.gmra.mxu0 %v239
    %v291 = vpop.f32.mrf.mxu0
    %v292 = vadd.f32 %v203, %v291
    %293 = vdwg.mxu0
    %v294 = vmax.f32 %v259, 0.0
    %v295 = vmax.f32 %v262, 0.0
    %v296 = vmax.f32 %v265, 0.0
    %v297 = vmax.f32 %v268, 0.0
    %v298 = vmax.f32 %v271, 0.0
    %v299 = vmax.f32 %v274, 0.0
    %v300 = vmax.f32 %v277, 0.0
    %v301 = vmax.f32 %v280, 0.0
    %v302 = vmax.f32 %v283, 0.0
    %v303 = vmax.f32 %v286, 0.0
    %v304 = vmax.f32 %v289, 0.0
    %v305 = vmax.f32 %v292, 0.0
    %vm306 = vcmask 785408
    %v308 = vsel %vm306, %v80, 0
    %v311 = vsel %vm306, %v81, 0
    %v314 = vsel %vm306, %v82, 0
    %v317 = vsel %vm306, %v83, 0
    %319 = vmatpush.msra.mxu0 0.0
    %320 = vmatpush.msra.mxu0 0.0
    %321 = vmatpush.msra.mxu0 0.0
    %322 = vmatpush.msra.mxu0 0.0
    %323 = vmatpush.msra.mxu0 %v305
    %324 = vmatpush.msra.mxu0 %v304
    %325 = vmatpush.msra.mxu0 %v303
    %326 = vmatpush.msra.mxu0 %v302
    %327 = vmatpush.msra.mxu0 %v301
    %328 = vmatpush.msra.mxu0 %v300
    %329 = vmatpush.msra.mxu0 %v299
    %330 = vmatpush.msra.mxu0 %v298
    %331 = vmatpush.msra.mxu0 %v297
    %332 = vmatpush.msra.mxu0 %v296
    %333 = vmatpush.msra.mxu0 %v295
    %334 = vmatpush.msra.mxu0 %v294
    %335 = vmatmul.f32.gmra.mxu0 %v308
    %v336 = vpop.f32.mrf.mxu0
    %v337 = vadd.f32 0.0, %v336
    %338 = vmatmul.f32.gmra.mxu0 %v311
    %v339 = vpop.f32.mrf.mxu0
    %v340 = vadd.f32 0.0, %v339
    %341 = vmatmul.f32.gmra.mxu0 %v314
    %v342 = vpop.f32.mrf.mxu0
    %v343 = vadd.f32 0.0, %v342
    %344 = vmatmul.f32.gmra.mxu0 %v317
    %v345 = vpop.f32.mrf.mxu0
    %v346 = vadd.f32 0.0, %v345
    %347 = vdwg.mxu0
    %v348 = vadd.f32 %v337, %v113
    %v349 = vadd.f32 %v340, %v116
    %v350 = vadd.f32 %v343, %v113
    %v351 = vadd.f32 %v346, %v116
    %354 = vrot.lane.b32.xlu0 %v350, 32
    %v355 = vpop.permute.xlu0 %354
    %356 = vrot.lane.b32.xlu0 %v351, 32
    %v357 = vpop.permute.xlu0 %356
    %vm360 = vcmask 261120
    %v361 = vsel %vm360, %v348, %v355
    %v362 = vsel %vm360, %v349, %v357
    %v363 = vperm.slane %v13, 3
    %vm364 = vcmask 523264
    %v366 = vsel %vm364, %v361, 0
    %v369 = vsel %vm364, %v362, 0
    %371 = vmatpush.msra.mxu0 0.0
    %372 = vmatpush.msra.mxu0 0.0
    %373 = vmatpush.msra.mxu0 0.0
    %374 = vmatpush.msra.mxu0 0.0
    %375 = vmatpush.msra.mxu0 0.0
    %376 = vmatpush.msra.mxu0 0.0
    %377 = vmatpush.msra.mxu0 0.0
    %378 = vmatpush.msra.mxu0 0.0
    %379 = vmatpush.msra.mxu0 %v21
    %380 = vmatpush.msra.mxu0 %v20
    %381 = vmatpush.msra.mxu0 %v19
    %382 = vmatpush.msra.mxu0 %v18
    %383 = vmatpush.msra.mxu0 %v17
    %384 = vmatpush.msra.mxu0 %v16
    %385 = vmatpush.msra.mxu0 %v15
    %386 = vmatpush.msra.mxu0 %v14
    %387 = vmatmul.f32.gmra.mxu0 %v366
    %v388 = vpop.f32.mrf.mxu0
    %v389 = vadd.f32 %v363, %v388
    %390 = vmatmul.f32.gmra.mxu0 %v369
    %v391 = vpop.f32.mrf.mxu0
    %v392 = vadd.f32 %v363, %v391
    %393 = vdwg.mxu0
    %v394 = vmax.f32 %v389, 0.0
    %v395 = vmax.f32 %v392, 0.0
    %v396 = vperm.slane %v13, 4
    %v398 = vsel %vm364, %v394, 0
    %v401 = vsel %vm364, %v395, 0
    %403 = vmatpush.msra.mxu0 0.0
    %404 = vmatpush.msra.mxu0 0.0
    %405 = vmatpush.msra.mxu0 0.0
    %406 = vmatpush.msra.mxu0 0.0
    %407 = vmatpush.msra.mxu0 0.0
    %408 = vmatpush.msra.mxu0 0.0
    %409 = vmatpush.msra.mxu0 0.0
    %410 = vmatpush.msra.mxu0 0.0
    %411 = vmatpush.msra.mxu0 %v29
    %412 = vmatpush.msra.mxu0 %v28
    %413 = vmatpush.msra.mxu0 %v27
    %414 = vmatpush.msra.mxu0 %v26
    %415 = vmatpush.msra.mxu0 %v25
    %416 = vmatpush.msra.mxu0 %v24
    %417 = vmatpush.msra.mxu0 %v23
    %418 = vmatpush.msra.mxu0 %v22
    %419 = vmatmul.f32.gmra.mxu0 %v398
    %v420 = vpop.f32.mrf.mxu0
    %v421 = vadd.f32 %v396, %v420
    %422 = vmatmul.f32.gmra.mxu0 %v401
    %v423 = vpop.f32.mrf.mxu0
    %v424 = vadd.f32 %v396, %v423
    %425 = vdwg.mxu0
    %428 = vrot.lane.b32.xlu0 %v421, 32
    %v429 = vpop.permute.xlu0 %428
    %430 = vrot.lane.b32.xlu0 %v424, 32
    %v431 = vpop.permute.xlu0 %430
    %v434 = vsel %vm360, %v113, %v429
    %v435 = vsel %vm360, %v116, %v431
    %v436 = vperm.slane %v13, 5
    %v438 = vsel %vm306, %v434, 0
    %v441 = vsel %vm306, %v435, 0
    %443 = vmatpush.msra.mxu0 0.0
    %444 = vmatpush.msra.mxu0 0.0
    %445 = vmatpush.msra.mxu0 0.0
    %446 = vmatpush.msra.mxu0 0.0
    %447 = vmatpush.msra.mxu0 %v41
    %448 = vmatpush.msra.mxu0 %v40
    %449 = vmatpush.msra.mxu0 %v39
    %450 = vmatpush.msra.mxu0 %v38
    %451 = vmatpush.msra.mxu0 %v37
    %452 = vmatpush.msra.mxu0 %v36
    %453 = vmatpush.msra.mxu0 %v35
    %454 = vmatpush.msra.mxu0 %v34
    %455 = vmatpush.msra.mxu0 %v33
    %456 = vmatpush.msra.mxu0 %v32
    %457 = vmatpush.msra.mxu0 %v31
    %458 = vmatpush.msra.mxu0 %v30
    %459 = vmatmul.f32.gmra.mxu0 %v438
    %v460 = vpop.f32.mrf.mxu0
    %v461 = vadd.f32 %v436, %v460
    %462 = vmatmul.f32.gmra.mxu0 %v441
    %v463 = vpop.f32.mrf.mxu0
    %v464 = vadd.f32 %v436, %v463
    %465 = vdwg.mxu0
    %v466 = vmax.f32 %v461, 0.0
    %v467 = vmax.f32 %v464, 0.0
    %v469 = vsel %vm364, %v466, 0
    %v472 = vsel %vm364, %v467, 0
    %474 = vmatpush.msra.mxu0 0.0
    %475 = vmatpush.msra.mxu0 0.0
    %476 = vmatpush.msra.mxu0 0.0
    %477 = vmatpush.msra.mxu0 0.0
    %478 = vmatpush.msra.mxu0 0.0
    %479 = vmatpush.msra.mxu0 0.0
    %480 = vmatpush.msra.mxu0 0.0
    %481 = vmatpush.msra.mxu0 0.0
    %482 = vmatpush.msra.mxu0 %v49
    %483 = vmatpush.msra.mxu0 %v48
    %484 = vmatpush.msra.mxu0 %v47
    %485 = vmatpush.msra.mxu0 %v46
    %486 = vmatpush.msra.mxu0 %v45
    %487 = vmatpush.msra.mxu0 %v44
    %488 = vmatpush.msra.mxu0 %v43
    %489 = vmatpush.msra.mxu0 %v42
    %490 = vmatmul.f32.gmra.mxu0 %v469
    %v491 = vpop.f32.mrf.mxu0
    %v492 = vadd.f32 0.0, %v491
    %493 = vmatmul.f32.gmra.mxu0 %v472
    %v494 = vpop.f32.mrf.mxu0
    %v495 = vadd.f32 0.0, %v494
    %496 = vdwg.mxu0
    %v497 = vadd.f32 %v113, %v492
    %v498 = vadd.f32 %v116, %v495
    %v499 = vperm.slane %v13, 6
    %v500 = vadd.f32 %v497, %v499
    %v501 = vadd.f32 %v498, %v499
    %502 = vmatpush.msra.mxu0 0.0
    %503 = vmatpush.msra.mxu0 0.0
    %504 = vmatpush.msra.mxu0 0.0
    %505 = vmatpush.msra.mxu0 0.0
    %506 = vmatpush.msra.mxu0 0.0
    %507 = vmatpush.msra.mxu0 0.0
    %508 = vmatpush.msra.mxu0 0.0
    %509 = vmatpush.msra.mxu0 0.0
    %510 = vmatpush.msra.mxu0 0.0
    %511 = vmatpush.msra.mxu0 0.0
    %512 = vmatpush.msra.mxu0 0.0
    %513 = vmatpush.msra.mxu0 0.0
    %514 = vmatpush.msra.mxu0 0.0
    %515 = vmatpush.msra.mxu0 0.0
    %516 = vmatpush.msra.mxu0 %v501
    %517 = vmatpush.msra.mxu0 %v500
    %518 = vmatmul.f32.gmra.mxu0 %v206
    %v519 = vpop.f32.mrf.mxu0
    %v520 = vadd.f32 %v192, %v519
    %521 = vmatmul.f32.gmra.mxu0 %v209
    %v522 = vpop.f32.mrf.mxu0
    %v523 = vadd.f32 %v193, %v522
    %524 = vmatmul.f32.gmra.mxu0 %v212
    %v525 = vpop.f32.mrf.mxu0
    %v526 = vadd.f32 %v194, %v525
    %527 = vmatmul.f32.gmra.mxu0 %v215
    %v528 = vpop.f32.mrf.mxu0
    %v529 = vadd.f32 %v195, %v528
    %530 = vmatmul.f32.gmra.mxu0 %v218
    %v531 = vpop.f32.mrf.mxu0
    %v532 = vadd.f32 %v196, %v531
    %533 = vmatmul.f32.gmra.mxu0 %v221
    %v534 = vpop.f32.mrf.mxu0
    %v535 = vadd.f32 %v197, %v534
    %536 = vmatmul.f32.gmra.mxu0 %v224
    %v537 = vpop.f32.mrf.mxu0
    %v538 = vadd.f32 %v198, %v537
    %539 = vmatmul.f32.gmra.mxu0 %v227
    %v540 = vpop.f32.mrf.mxu0
    %v541 = vadd.f32 %v199, %v540
    %542 = vmatmul.f32.gmra.mxu0 %v230
    %v543 = vpop.f32.mrf.mxu0
    %v544 = vadd.f32 %v200, %v543
    %545 = vmatmul.f32.gmra.mxu0 %v233
    %v546 = vpop.f32.mrf.mxu0
    %v547 = vadd.f32 %v201, %v546
    %548 = vmatmul.f32.gmra.mxu0 %v236
    %v549 = vpop.f32.mrf.mxu0
    %v550 = vadd.f32 %v202, %v549
    %551 = vmatmul.f32.gmra.mxu0 %v239
    %v552 = vpop.f32.mrf.mxu0
    %v553 = vadd.f32 %v203, %v552
    %554 = vdwg.mxu0
    %v555 = vmax.f32 %v520, 0.0
    %v556 = vmax.f32 %v523, 0.0
    %v557 = vmax.f32 %v526, 0.0
    %v558 = vmax.f32 %v529, 0.0
    %v559 = vmax.f32 %v532, 0.0
    %v560 = vmax.f32 %v535, 0.0
    %v561 = vmax.f32 %v538, 0.0
    %v562 = vmax.f32 %v541, 0.0
    %v563 = vmax.f32 %v544, 0.0
    %v564 = vmax.f32 %v547, 0.0
    %v565 = vmax.f32 %v550, 0.0
    %v566 = vmax.f32 %v553, 0.0
    %567 = vmatpush.msra.mxu0 0.0
    %568 = vmatpush.msra.mxu0 0.0
    %569 = vmatpush.msra.mxu0 0.0
    %570 = vmatpush.msra.mxu0 0.0
    %571 = vmatpush.msra.mxu0 %v566
    %572 = vmatpush.msra.mxu0 %v565
    %573 = vmatpush.msra.mxu0 %v564
    %574 = vmatpush.msra.mxu0 %v563
    %575 = vmatpush.msra.mxu0 %v562
    %576 = vmatpush.msra.mxu0 %v561
    %577 = vmatpush.msra.mxu0 %v560
    %578 = vmatpush.msra.mxu0 %v559
    %579 = vmatpush.msra.mxu0 %v558
    %580 = vmatpush.msra.mxu0 %v557
    %581 = vmatpush.msra.mxu0 %v556
    %582 = vmatpush.msra.mxu0 %v555
    %583 = vmatmul.f32.gmra.mxu0 %v308
    %v584 = vpop.f32.mrf.mxu0
    %v585 = vadd.f32 0.0, %v584
    %586 = vmatmul.f32.gmra.mxu0 %v311
    %v587 = vpop.f32.mrf.mxu0
    %v588 = vadd.f32 0.0, %v587
    %589 = vmatmul.f32.gmra.mxu0 %v314
    %v590 = vpop.f32.mrf.mxu0
    %v591 = vadd.f32 0.0, %v590
    %592 = vmatmul.f32.gmra.mxu0 %v317
    %v593 = vpop.f32.mrf.mxu0
    %v594 = vadd.f32 0.0, %v593
    %595 = vdwg.mxu0
    %v596 = vadd.f32 %v585, %v500
    %v597 = vadd.f32 %v588, %v501
    %v598 = vadd.f32 %v591, %v500
    %v599 = vadd.f32 %v594, %v501
    %602 = vrot.lane.b32.xlu0 %v598, 32
    %v603 = vpop.permute.xlu0 %602
    %604 = vrot.lane.b32.xlu0 %v599, 32
    %v605 = vpop.permute.xlu0 %604
    %v608 = vsel %vm360, %v596, %v603
    %v609 = vsel %vm360, %v597, %v605
    %v611 = vsel %vm364, %v608, 0
    %v614 = vsel %vm364, %v609, 0
    %616 = vmatpush.msra.mxu0 0.0
    %617 = vmatpush.msra.mxu0 0.0
    %618 = vmatpush.msra.mxu0 0.0
    %619 = vmatpush.msra.mxu0 0.0
    %620 = vmatpush.msra.mxu0 0.0
    %621 = vmatpush.msra.mxu0 0.0
    %622 = vmatpush.msra.mxu0 0.0
    %623 = vmatpush.msra.mxu0 0.0
    %624 = vmatpush.msra.mxu0 %v21
    %625 = vmatpush.msra.mxu0 %v20
    %626 = vmatpush.msra.mxu0 %v19
    %627 = vmatpush.msra.mxu0 %v18
    %628 = vmatpush.msra.mxu0 %v17
    %629 = vmatpush.msra.mxu0 %v16
    %630 = vmatpush.msra.mxu0 %v15
    %631 = vmatpush.msra.mxu0 %v14
    %632 = vmatmul.f32.gmra.mxu0 %v611
    %v633 = vpop.f32.mrf.mxu0
    %v634 = vadd.f32 %v363, %v633
    %635 = vmatmul.f32.gmra.mxu0 %v614
    %v636 = vpop.f32.mrf.mxu0
    %v637 = vadd.f32 %v363, %v636
    %638 = vdwg.mxu0
    %v639 = vmax.f32 %v634, 0.0
    %v640 = vmax.f32 %v637, 0.0
    %v642 = vsel %vm364, %v639, 0
    %v645 = vsel %vm364, %v640, 0
    %647 = vmatpush.msra.mxu0 0.0
    %648 = vmatpush.msra.mxu0 0.0
    %649 = vmatpush.msra.mxu0 0.0
    %650 = vmatpush.msra.mxu0 0.0
    %651 = vmatpush.msra.mxu0 0.0
    %652 = vmatpush.msra.mxu0 0.0
    %653 = vmatpush.msra.mxu0 0.0
    %654 = vmatpush.msra.mxu0 0.0
    %655 = vmatpush.msra.mxu0 %v29
    %656 = vmatpush.msra.mxu0 %v28
    %657 = vmatpush.msra.mxu0 %v27
    %658 = vmatpush.msra.mxu0 %v26
    %659 = vmatpush.msra.mxu0 %v25
    %660 = vmatpush.msra.mxu0 %v24
    %661 = vmatpush.msra.mxu0 %v23
    %662 = vmatpush.msra.mxu0 %v22
    %663 = vmatmul.f32.gmra.mxu0 %v642
    %v664 = vpop.f32.mrf.mxu0
    %v665 = vadd.f32 %v396, %v664
    %666 = vmatmul.f32.gmra.mxu0 %v645
    %v667 = vpop.f32.mrf.mxu0
    %v668 = vadd.f32 %v396, %v667
    %669 = vdwg.mxu0
    %672 = vrot.lane.b32.xlu0 %v665, 32
    %v673 = vpop.permute.xlu0 %672
    %674 = vrot.lane.b32.xlu0 %v668, 32
    %v675 = vpop.permute.xlu0 %674
    %v678 = vsel %vm360, %v500, %v673
    %v679 = vsel %vm360, %v501, %v675
    %v681 = vsel %vm306, %v678, 0
    %v684 = vsel %vm306, %v679, 0
    %686 = vmatpush.msra.mxu0 0.0
    %687 = vmatpush.msra.mxu0 0.0
    %688 = vmatpush.msra.mxu0 0.0
    %689 = vmatpush.msra.mxu0 0.0
    %690 = vmatpush.msra.mxu0 %v41
    %691 = vmatpush.msra.mxu0 %v40
    %692 = vmatpush.msra.mxu0 %v39
    %693 = vmatpush.msra.mxu0 %v38
    %694 = vmatpush.msra.mxu0 %v37
    %695 = vmatpush.msra.mxu0 %v36
    %696 = vmatpush.msra.mxu0 %v35
    %697 = vmatpush.msra.mxu0 %v34
    %698 = vmatpush.msra.mxu0 %v33
    %699 = vmatpush.msra.mxu0 %v32
    %700 = vmatpush.msra.mxu0 %v31
    %701 = vmatpush.msra.mxu0 %v30
    %702 = vmatmul.f32.gmra.mxu0 %v681
    %v703 = vpop.f32.mrf.mxu0
    %v704 = vadd.f32 %v436, %v703
    %705 = vmatmul.f32.gmra.mxu0 %v684
    %v706 = vpop.f32.mrf.mxu0
    %v707 = vadd.f32 %v436, %v706
    %708 = vdwg.mxu0
    %v709 = vmax.f32 %v704, 0.0
    %v710 = vmax.f32 %v707, 0.0
    %v712 = vsel %vm364, %v709, 0
    %v715 = vsel %vm364, %v710, 0
    %717 = vmatpush.msra.mxu0 0.0
    %718 = vmatpush.msra.mxu0 0.0
    %719 = vmatpush.msra.mxu0 0.0
    %720 = vmatpush.msra.mxu0 0.0
    %721 = vmatpush.msra.mxu0 0.0
    %722 = vmatpush.msra.mxu0 0.0
    %723 = vmatpush.msra.mxu0 0.0
    %724 = vmatpush.msra.mxu0 0.0
    %725 = vmatpush.msra.mxu0 %v49
    %726 = vmatpush.msra.mxu0 %v48
    %727 = vmatpush.msra.mxu0 %v47
    %728 = vmatpush.msra.mxu0 %v46
    %729 = vmatpush.msra.mxu0 %v45
    %730 = vmatpush.msra.mxu0 %v44
    %731 = vmatpush.msra.mxu0 %v43
    %732 = vmatpush.msra.mxu0 %v42
    %733 = vmatmul.f32.gmra.mxu0 %v712
    %v734 = vpop.f32.mrf.mxu0
    %v735 = vadd.f32 0.0, %v734
    %736 = vmatmul.f32.gmra.mxu0 %v715
    %v737 = vpop.f32.mrf.mxu0
    %v738 = vadd.f32 0.0, %v737
    %739 = vdwg.mxu0
    %v740 = vadd.f32 %v500, %v735
    %v741 = vadd.f32 %v501, %v738
    %v742 = vadd.f32 %v740, %v499
    %v743 = vadd.f32 %v741, %v499
    %v744 = vperm.slane %v13, 7
    %v746 = vsel %vm360, %v742, 0
    %v749 = vsel %vm360, %v743, 0
    %751 = vmatpush.msra.mxu0 0.0
    %752 = vmatpush.msra.mxu0 0.0
    %753 = vmatpush.msra.mxu0 0.0
    %754 = vmatpush.msra.mxu0 0.0
    %755 = vmatpush.msra.mxu0 0.0
    %756 = vmatpush.msra.mxu0 0.0
    %757 = vmatpush.msra.mxu0 0.0
    %758 = vmatpush.msra.mxu0 0.0
    %759 = vmatpush.msra.mxu0 0.0
    %760 = vmatpush.msra.mxu0 0.0
    %761 = vmatpush.msra.mxu0 0.0
    %762 = vmatpush.msra.mxu0 0.0
    %763 = vmatpush.msra.mxu0 %v53
    %764 = vmatpush.msra.mxu0 %v52
    %765 = vmatpush.msra.mxu0 %v51
    %766 = vmatpush.msra.mxu0 %v50
    %767 = vmatmul.f32.gmra.mxu0 %v746
    %v768 = vpop.f32.mrf.mxu0
    %v769 = vadd.f32 %v744, %v768
    %770 = vmatmul.f32.gmra.mxu0 %v749
    %v771 = vpop.f32.mrf.mxu0
    %v772 = vadd.f32 %v744, %v771
    %773 = vdwg.mxu0
    %v775 = vsel %vm204, %v86, 0
    %777 = vmatpush.msra.mxu0 0.0
    %778 = vmatpush.msra.mxu0 0.0
    %779 = vmatpush.msra.mxu0 0.0
    %780 = vmatpush.msra.mxu0 0.0
    %781 = vmatpush.msra.mxu0 0.0
    %782 = vmatpush.msra.mxu0 0.0
    %783 = vmatpush.msra.mxu0 0.0
    %784 = vmatpush.msra.mxu0 0.0
    %785 = vmatpush.msra.mxu0 0.0
    %786 = vmatpush.msra.mxu0 0.0
    %787 = vmatpush.msra.mxu0 0.0
    %788 = vmatpush.msra.mxu0 0.0
    %789 = vmatpush.msra.mxu0 0.0
    %790 = vmatpush.msra.mxu0 0.0
    %791 = vmatpush.msra.mxu0 %v772
    %792 = vmatpush.msra.mxu0 %v769
    %793 = vmatmul.f32.gmra.mxu0 %v775
    %v794 = vpop.f32.mrf.mxu0
    %v795 = vadd.f32 0.0, %v794
    %796 = vdwg.mxu0
    %vm797 = vcmp.gt.f32.partialorder %v84, 0.5
    %vm798 = vcmp.gt.f32.partialorder %v85, 0.5
    %v799 = vsel %vm797, 1, 0
    %v800 = vsel %vm798, 1, 0
    %801 = vset.pattern.permute.xlu0 0
    %802 = vperm.xlu0 %801, %v799
    %v803 = vpop.permute.xlu0 %802
    %804 = vset.pattern.permute.xlu0 0
    %805 = vperm.xlu0 %804, %v800
    %v806 = vpop.permute.xlu0 %805
    %vm807 = vcmp.eq.s32.totalorder %v803, 1
    %vm808 = vcmp.eq.s32.totalorder %v806, 1
    %v809 = vsel %vm807, %v769, -3.4028235e+38
    %v810 = vsel %vm808, %v772, -3.4028235e+38
    %v811 = vsel %vm364, %v809, -inf
    %v812 = vsel %vm364, %v810, -inf
    %v813 = vmax.f32 %v811, %v812
    %v814 = vrot.slane %v813, 4
    %v815 = vmax.f32 %v813, %v814
    %v816 = vrot.slane %v815, 2
    %v817 = vmax.f32 %v815, %v816
    %v818 = vrot.slane %v817, 1
    %v819 = vmax.f32 %v817, %v818
    %820 = vset.pattern.permute.xlu0 1
    %821 = vperm.xlu0 %820, %v799
    %v822 = vpop.permute.xlu0 %821
    %823 = vset.pattern.permute.xlu0 1
    %824 = vperm.xlu0 %823, %v800
    %v825 = vpop.permute.xlu0 %824
    %vm826 = vcmp.eq.s32.totalorder %v822, 1
    %vm827 = vcmp.eq.s32.totalorder %v825, 1
    %v828 = vsel %vm826, %v769, -3.4028235e+38
    %v829 = vsel %vm827, %v772, -3.4028235e+38
    %v830 = vsel %vm364, %v828, -inf
    %v831 = vsel %vm364, %v829, -inf
    %v832 = vmax.f32 %v830, %v831
    %v833 = vrot.slane %v832, 4
    %v834 = vmax.f32 %v832, %v833
    %v835 = vrot.slane %v834, 2
    %v836 = vmax.f32 %v834, %v835
    %v837 = vrot.slane %v836, 1
    %v838 = vmax.f32 %v836, %v837
    %vm839 = vcmask 1040384
    %v840 = vsel %vm839, %v819, %v838
    %842 = vrot.lane.b32.xlu0 %v795, 64
    %v843 = vpop.permute.xlu0 %842
    %v845 = vsel %vm364, %v840, %v843
    %846 = vst [vmem:[#allocation2] sm:$0x3] %v845
    // Predicated region
    $region10: #{forward.1} parent=1 // pred_check
      _
    $region11: #{forward.1} parent=1 // pred_check_branch
      %848 = sbr.rel (0) target = $region13
    $region12: #{forward.1} parent=1 // pred_region
      %850 = vsyncadd [#allocation3], 0
      %s852 = sshll.u32 [#allocation2], 4
      %s853 = int_to_ptr.vmem [resolvable:$true] %s852
      %s854 = sshll.u32 %s2, 4
      %s855 = int_to_ptr.hbm [resolvable:$true] %s854
      %857 = dma.vmem_to_hbm [thread:$0]  %s853, 32, %s855, [#allocation3]
    $region13: #{forward.1} parent=1 // pred_fallthru
      _
    // Predicated region
    $region14: #{forward.1} parent=1 // pred_check
      _
    $region15: #{forward.1} parent=1 // pred_check_branch
      %859 = sbr.rel (0) target = $region17
    $region16: #{forward.1} parent=1 // pred_region
      %861 = dma.done [#allocation3], 32
    $region17: #{forward.1} parent=1 // pred_fallthru
      _
    %862 = vsyncpa [#allocation3], 1

</llo_original>
